<compile_context>
chip_gen: v7x
topology: tpu7x:2x2x1
jax: 0.10.0
libtpu: 0.0.40
codegen_flags: <defaults>
</compile_context>

<pallas_src>
import math

import jax
import jax.numpy as jnp
from jax.experimental import pallas as pl
from jax.experimental.pallas import tpu as pltpu


def _expnorm_kernel(cutoff_upper, cutoff_lower, alpha):
    pi_over_cut = math.pi / cutoff_upper

    def kernel(dist_ref, means_ref, betas_ref, out_ref):
        d = dist_ref[...]            # (1, tile_e)        float32, lane-dense
        m = means_ref[:, 0:1]        # (num_rbf, 1)       float32
        b = betas_ref[:, 0:1]        # (num_rbf, 1)       float32

        # CosineCutoff(0, cutoff_upper): the torchmd module always builds the
        # cutoff with lower bound 0, so only this branch is needed.
        cut = 0.5 * (jnp.cos(d * pi_over_cut) + 1.0)
        cut = cut * (d < cutoff_upper).astype(d.dtype)             # (1, tile_e)

        exp_d = jnp.exp(alpha * (cutoff_lower - d))                # (1, tile_e)
        g = exp_d - m                                              # (num_rbf, tile_e)
        vals = cut * jnp.exp(-b * g * g)                           # (num_rbf, tile_e)

        # Fold the [num_rbf, E] -> [E, num_rbf] layout change into the store
        # (XLU transpose, otherwise idle) so no separate post-kernel HBM pass
        # over the full output is needed.
        out_ref[...] = vals.T.astype(out_ref.dtype)

    return kernel


def exp_normal_smearing(dist, means, betas, *, cutoff_lower=0.0,
                        cutoff_upper=5.0, tile_e=4096, out_dtype=jnp.float32):
    """dist: [E] -> [E, num_rbf]. Math in float32; output cast to out_dtype."""
    num_rbf = means.shape[0]
    alpha = 5.0 / (cutoff_upper - cutoff_lower)
    E = dist.shape[0]

    if E == 0:
        return jnp.zeros((0, num_rbf), out_dtype)

    # Lane tile must be a multiple of 128; don't over-pad tiny inputs.
    tile_e = max(128, (tile_e // 128) * 128)
    e_pad128 = ((E + 127) // 128) * 128
    # Keep >= 2 grid steps whenever E allows it so the "parallel" grid axis
    # can be sharded across both TensorCores on v7x (v5e/v6e don't care).
    if e_pad128 >= 256:
        tile_e = min(tile_e, max(128, (e_pad128 // 2 // 128) * 128))
    tile_e = min(tile_e, e_pad128)
    E_pad = ((E + tile_e - 1) // tile_e) * tile_e

    # Pad with a distance beyond the cutoff so padded rows compute to exactly 0
    # (garbage can't leak even before the final slice).
    dist_row = jnp.pad(dist.astype(jnp.float32), (0, E_pad - E),
                       constant_values=cutoff_upper + 1.0).reshape(1, E_pad)

    # Parameters stay tiny (num_rbf x 128, ~25 KB each), are VMEM-resident via
    # the constant index_map, and are lane-broadcast once inside the kernel.
    means_p = jnp.broadcast_to(means.astype(jnp.float32)[:, None], (num_rbf, 128))
    betas_p = jnp.broadcast_to(betas.astype(jnp.float32)[:, None], (num_rbf, 128))

    grid = (E_pad // tile_e,)
    out = pl.pallas_call(
        _expnorm_kernel(cutoff_upper, cutoff_lower, alpha),
        out_shape=jax.ShapeDtypeStruct((E_pad, num_rbf), out_dtype),
        grid_spec=pltpu.PrefetchScalarGridSpec(
            num_scalar_prefetch=0,
            grid=grid,
            in_specs=[
                pl.BlockSpec((1, tile_e), lambda i: (0, i)),
                pl.BlockSpec((num_rbf, 128), lambda i: (0, 0)),
                pl.BlockSpec((num_rbf, 128), lambda i: (0, 0)),
            ],
            out_specs=pl.BlockSpec((tile_e, num_rbf), lambda i: (i, 0)),
        ),
        compiler_params=pltpu.CompilerParams(
            dimension_semantics=("parallel",)),
    )(dist_row, means_p, betas_p)

    if E_pad == E:
        return out
    return out[:E]


def initial_params(cutoff_lower=0.0, cutoff_upper=5.0, num_rbf=50):
    """Deterministic parameter init, matching ExpNormalSmearing._initial_params."""
    start_value = math.exp(-cutoff_upper + cutoff_lower)
    means = jnp.linspace(start_value, 1.0, num_rbf, dtype=jnp.float32)
    betas = jnp.full((num_rbf,),
                     (2.0 / num_rbf * (1.0 - start_value)) ** (-2),
                     dtype=jnp.float32)
    return means, betas


def reference(dist, means, betas, cutoff_lower=0.0, cutoff_upper=5.0):
    alpha = 5.0 / (cutoff_upper - cutoff_lower)
    d = dist[:, None].astype(jnp.float32)
    cut = 0.5 * (jnp.cos(d * math.pi / cutoff_upper) + 1.0)
    cut = cut * (d < cutoff_upper).astype(jnp.float32)
    return cut * jnp.exp(-betas[None, :] *
                         (jnp.exp(alpha * (cutoff_lower - d)) - means[None, :]) ** 2)


if __name__ == "__main__":
    cutoff_lower, cutoff_upper, num_rbf = 0.0, 5.0, 50
    key = jax.random.PRNGKey(0)
    k_main, k_ragged = jax.random.split(key)

    means, betas = initial_params(cutoff_lower, cutoff_upper, num_rbf)

    # Main case: E a multiple of 128 -> no padding, no post-slice; 2 grid steps.
    E = 2048
    dist = jax.random.uniform(k_main, (E,), jnp.float32,
                              minval=0.0, maxval=cutoff_upper + 1.0)
    out = exp_normal_smearing(dist, means, betas,
                              cutoff_lower=cutoff_lower,
                              cutoff_upper=cutoff_upper)
    out = jax.block_until_ready(out)
    ref = reference(dist, means, betas, cutoff_lower, cutoff_upper)
    assert out.shape == (E, num_rbf)
    assert jnp.max(jnp.abs(out - ref)) < 1e-5

    # Ragged case: exercises padding + final row slice.
    E2 = 300
    dist2 = jax.random.uniform(k_ragged, (E2,), jnp.float32,
                               minval=0.0, maxval=cutoff_upper + 1.0)
    out2 = jax.block_until_ready(
        exp_normal_smearing(dist2, means, betas,
                            cutoff_lower=cutoff_lower,
                            cutoff_upper=cutoff_upper))
    ref2 = reference(dist2, means, betas, cutoff_lower, cutoff_upper)
    assert out2.shape == (E2, num_rbf)
    assert jnp.max(jnp.abs(out2 - ref2)) < 1e-5

    print("KERNEL_OK")
</pallas_src>

<mosaic_0001>
module attributes {stable_mosaic.version = 11 : i64} {
  func.func @kernel(%arg0: i32, %arg1: memref<1x1024xf32, #tpu.memory_space<vmem>>, %arg2: memref<50x128xf32, #tpu.memory_space<vmem>>, %arg3: memref<50x128xf32, #tpu.memory_space<vmem>>, %arg4: memref<1024x50xf32, #tpu.memory_space<vmem>>) attributes {dimension_semantics = [#tpu.dimension_semantics<parallel>], iteration_bounds = array<i64: 2>, scalar_prefetch = 0 : i64, scratch_operands = 0 : i64, tpu.core_type = #tpu.core_type<tc>, window_params = [{transform_indices = @transform_0, window_bounds = array<i64: 1, 1024>}, {pipeline_mode = #tpu.pipeline_mode<synchronous>, transform_indices = @transform_1, window_bounds = array<i64: 50, 128>}, {pipeline_mode = #tpu.pipeline_mode<synchronous>, transform_indices = @transform_2, window_bounds = array<i64: 50, 128>}, {transform_indices = @transform_3, window_bounds = array<i64: 1024, 50>}]} {
    %c0 = arith.constant 0 : index
    %c0_0 = arith.constant 0 : index
    %0 = vector.load %arg1[%c0, %c0_0] : memref<1x1024xf32, #tpu.memory_space<vmem>>, vector<1x1024xf32>
    %c0_1 = arith.constant 0 : index
    %c0_2 = arith.constant 0 : index
    %1 = vector.load %arg2[%c0_1, %c0_2] : memref<50x128xf32, #tpu.memory_space<vmem>>, vector<50x1xf32>
    %c0_3 = arith.constant 0 : index
    %c0_4 = arith.constant 0 : index
    %2 = vector.load %arg3[%c0_3, %c0_4] : memref<50x128xf32, #tpu.memory_space<vmem>>, vector<50x1xf32>
    %cst = arith.constant 0.628318548 : f32
    %3 = vector.broadcast %cst : f32 to vector<1x1024xf32>
    %4 = arith.mulf %0, %3 : vector<1x1024xf32>
    %5 = math.cos %4 : vector<1x1024xf32>
    %cst_5 = arith.constant 1.000000e+00 : f32
    %6 = vector.broadcast %cst_5 : f32 to vector<1x1024xf32>
    %7 = arith.addf %5, %6 : vector<1x1024xf32>
    %cst_6 = arith.constant 5.000000e-01 : f32
    %8 = vector.broadcast %cst_6 : f32 to vector<1x1024xf32>
    %9 = arith.mulf %8, %7 : vector<1x1024xf32>
    %cst_7 = arith.constant 5.000000e+00 : f32
    %10 = vector.broadcast %cst_7 : f32 to vector<1x1024xf32>
    %11 = arith.cmpf olt, %0, %10 : vector<1x1024xf32>
    %12 = arith.extui %11 : vector<1x1024xi1> to vector<1x1024xi32>
    %13 = arith.sitofp %12 : vector<1x1024xi32> to vector<1x1024xf32>
    %14 = arith.mulf %9, %13 : vector<1x1024xf32>
    %cst_8 = arith.constant 0.000000e+00 : f32
    %15 = vector.broadcast %cst_8 : f32 to vector<1x1024xf32>
    %16 = arith.subf %15, %0 : vector<1x1024xf32>
    %cst_9 = arith.constant 1.000000e+00 : f32
    %17 = vector.broadcast %cst_9 : f32 to vector<1x1024xf32>
    %18 = arith.mulf %17, %16 : vector<1x1024xf32>
    %19 = math.exp %18 : vector<1x1024xf32>
    %20 = vector.broadcast %19 : vector<1x1024xf32> to vector<50x1024xf32>
    %21 = vector.broadcast %1 : vector<50x1xf32> to vector<50x1024xf32>
    %22 = arith.subf %20, %21 : vector<50x1024xf32>
    %cst_10 = arith.constant 0.000000e+00 : f32
    %23 = vector.broadcast %cst_10 : f32 to vector<50x1xf32>
    %24 = arith.subf %23, %2 : vector<50x1xf32>
    %25 = vector.broadcast %24 : vector<50x1xf32> to vector<50x1024xf32>
    %26 = arith.mulf %25, %22 : vector<50x1024xf32>
    %27 = arith.mulf %26, %22 : vector<50x1024xf32>
    %28 = math.exp %27 : vector<50x1024xf32>
    %29 = vector.broadcast %14 : vector<1x1024xf32> to vector<50x1024xf32>
    %30 = arith.mulf %29, %28 : vector<50x1024xf32>
    %31 = tpu.transpose %30, [1, 0] : vector<50x1024xf32> -> vector<1024x50xf32>
    %c0_11 = arith.constant 0 : index
    %c0_12 = arith.constant 0 : index
    %32 = vector.load %arg4[%c0_11, %c0_12] : memref<1024x50xf32, #tpu.memory_space<vmem>>, vector<1024x50xf32>
    tpu.vector_store %arg4[%c0_11, %c0_12], %31 {strides = array<i32>} : memref<1024x50xf32, #tpu.memory_space<vmem>>, vector<1024x50xf32>,
    return
  }
  func.func @transform_0(%arg0: i32) -> (i32, i32) {
    %c0_i32 = arith.constant 0 : i32
    %c0_i32_0 = arith.constant 0 : i32
    return %c0_i32, %arg0 : i32, i32
  }
  func.func @transform_1(%arg0: i32) -> (i32, i32) {
    %c0_i32 = arith.constant 0 : i32
    %c0_i32_0 = arith.constant 0 : i32
    %c0_i32_1 = arith.constant 0 : i32
    return %c0_i32, %c0_i32_0 : i32, i32
  }
  func.func @transform_2(%arg0: i32) -> (i32, i32) {
    %c0_i32 = arith.constant 0 : i32
    %c0_i32_0 = arith.constant 0 : i32
    %c0_i32_1 = arith.constant 0 : i32
    return %c0_i32, %c0_i32_0 : i32, i32
  }
  func.func @transform_3(%arg0: i32) -> (i32, i32) {
    %c0_i32 = arith.constant 0 : i32
    %c0_i32_0 = arith.constant 0 : i32
    return %arg0, %c0_i32 : i32, i32
  }
}

</mosaic_0001>

<llo_original>
// kernel: tpu_custom_call.1
$region0: #{tpu_custom_call.1}
  #allocation0 [shape = 'u32[]', space=smem, size = 0x4, offset = 0x4, fixed_abs, tag = 'smem constant byte address 0x4 - core index']
  #allocation1 [shape = 'u32[144,128]{1,0:T(1,128)}', space=vmem, size = 0x12000, scoped, tag = 'internal scratch']
  %s0 = inlined_call_operand.hbm [shape: f32[1,2048], index: 0, kind: input, shape index: {}]
  %s1 = inlined_call_operand.hbm [shape: f32[50,128], index: 1, kind: input, shape index: {}]
  %s2 = inlined_call_operand.hbm [shape: f32[50,128], index: 2, kind: input, shape index: {}]
  %s3 = inlined_call_operand.vmem [shape: f32[2048,50], index: 3, kind: output, shape index: {}]
  %s4 = sld [smem:[#allocation0]]
  $region57: #{tpu_custom_call.1} parent=0
    _
  %s6 = ssub.s32 1, %s4
  %s7 = scalar_select 0, %s6, %s4
  $region1: #{tpu_custom_call.1} parent=0
    #allocation2 [shape = 'u8[8192]{0}', space=vmem, size = 0x2000, scoped, tag = 'input window, operand 0']
    #allocation3 [shape = 's32[2]{0}', space=sflag, size = 0x8, scoped, tag = 'scoped memory for tpu_custom_call.1']
    #allocation4 [shape = 'u8[28672]{0}', space=vmem, size = 0x7000, scoped, tag = 'input window, operand 1, single buffered']
    #allocation5 [shape = 's32[1]{0}', space=sflag, size = 0x4, scoped, tag = 'scoped memory for tpu_custom_call.1']
    #allocation6 [shape = 'u8[28672]{0}', space=vmem, size = 0x7000, scoped, tag = 'input window, operand 2, single buffered']
    %8 = vsyncpa [#allocation3], 0
    %s9 = scalar_lea.sflag [#allocation3], 1
    %10 = vsyncpa %s9, 0
    %11 = vsyncpa [#allocation5], 0
    loop: start=0, step=1, limit=4
    $region2: #{tpu_custom_call.1} parent=1 // loop_pre_header
      _
    $region3: #{tpu_custom_call.1} parent=1 // loop_header
      %s13 = sphi 0, %s17
      %p14 = scmp.ge.s32.totalorder %s13, 4
      %s23 = sphi 0, %s25
      %s26 = sphi 0, %s23
      %s27 = sphi 0, %s26
      %s43 = sphi 0, %s27
      %s47 = sphi 0, %s47
      %s49 = sphi 0, %s47
      %s50 = sphi 0, %s49
      %s64 = sphi 0, %s50
      %s68 = sphi 0, %s68
      %s70 = sphi 0, %s68
      %s71 = sphi 0, %s70
      %s85 = sphi 0, %s71
      %s91 = sphi 0, %s93
      %s94 = sphi 0, %s91
      %s95 = sphi 0, %s94
      %s111 = sphi 0, %s95
    $region4: #{tpu_custom_call.1} parent=1 // loop_header_branch
      %16 = sbr.rel (%p14) target = $region8
    $region5: #{tpu_custom_call.1} parent=1 // loop_body
      %s18 = ssub.s32 %s13, 1
      %s19 = ssub.s32 %s13, 2
      %s20 = sadd.s32 %s13, 1
      %s21 = ssub.s32 %s13, %s20
      %p22 = scmp.eq.s32.totalorder %s21, 0
      %s24 = sadd.s32 %s23, 1
      %s25 = scalar_select %p22, %s23, %s24
      %p28 = pneg %p22
      %p29 = scmp.eq.s32.totalorder %s13, 1
      %p30 = por %p28, %p29
      %p31 = scmp.ne.s32.totalorder %s23, %s26
      %p32 = scmp.eq.s32.totalorder %s13, 0
      %p33 = por %p31, %p32
      %p34 = scmp.ne.s32.totalorder %s23, %s26
      %p35 = scmp.eq.s32.totalorder %s18, 1
      %p36 = por %p34, %p35
      %p37 = scmp.ne.s32.totalorder %s26, %s27
      %p38 = scmp.eq.s32.totalorder %s18, 0
      %p39 = por %p37, %p38
      %p40 = scmp.ne.s32.totalorder %s26, %s27
      %p41 = scmp.eq.s32.totalorder %s19, 1
      %p42 = por %p40, %p41
      %p44 = scmp.ne.s32.totalorder %s27, %s43
      %p45 = scmp.eq.s32.totalorder %s19, 0
      %p46 = por %p44, %p45
      %s48 = sadd.s32 %s47, 1
      %p51 = scmp.eq.s32.totalorder %s13, 1
      %p52 = scmp.ne.s32.totalorder %s47, %s49
      %p53 = scmp.eq.s32.totalorder %s13, 0
      %p54 = por %p52, %p53
      %p55 = scmp.ne.s32.totalorder %s47, %s49
      %p56 = scmp.eq.s32.totalorder %s18, 1
      %p57 = por %p55, %p56
      %p58 = scmp.ne.s32.totalorder %s49, %s50
      %p59 = scmp.eq.s32.totalorder %s18, 0
      %p60 = por %p58, %p59
      %p61 = scmp.ne.s32.totalorder %s49, %s50
      %p62 = scmp.eq.s32.totalorder %s19, 1
      %p63 = por %p61, %p62
      %p65 = scmp.ne.s32.totalorder %s50, %s64
      %p66 = scmp.eq.s32.totalorder %s19, 0
      %p67 = por %p65, %p66
      %s69 = sadd.s32 %s68, 1
      %p72 = scmp.eq.s32.totalorder %s13, 1
      %p73 = scmp.ne.s32.totalorder %s68, %s70
      %p74 = scmp.eq.s32.totalorder %s13, 0
      %p75 = por %p73, %p74
      %p76 = scmp.ne.s32.totalorder %s68, %s70
      %p77 = scmp.eq.s32.totalorder %s18, 1
      %p78 = por %p76, %p77
      %p79 = scmp.ne.s32.totalorder %s70, %s71
      %p80 = scmp.eq.s32.totalorder %s18, 0
      %p81 = por %p79, %p80
      %p82 = scmp.ne.s32.totalorder %s70, %s71
      %p83 = scmp.eq.s32.totalorder %s19, 1
      %p84 = por %p82, %p83
      %p86 = scmp.ne.s32.totalorder %s71, %s85
      %p87 = scmp.eq.s32.totalorder %s19, 0
      %p88 = por %p86, %p87
      %s89 = ssub.s32 %s13, %s20
      %p90 = scmp.eq.s32.totalorder %s89, 0
      %s92 = sadd.s32 %s91, 1
      %s93 = scalar_select %p90, %s91, %s92
      %p96 = pneg %p90
      %p97 = scmp.eq.s32.totalorder %s13, 1
      %p98 = por %p96, %p97
      %p99 = scmp.ne.s32.totalorder %s91, %s94
      %p100 = scmp.eq.s32.totalorder %s13, 0
      %p101 = por %p99, %p100
      %p102 = scmp.ne.s32.totalorder %s91, %s94
      %p103 = scmp.eq.s32.totalorder %s18, 1
      %p104 = por %p102, %p103
      %p105 = scmp.ne.s32.totalorder %s94, %s95
      %p106 = scmp.eq.s32.totalorder %s18, 0
      %p107 = por %p105, %p106
      %p108 = scmp.ne.s32.totalorder %s94, %s95
      %p109 = scmp.eq.s32.totalorder %s19, 1
      %p110 = por %p108, %p109
      %p112 = scmp.ne.s32.totalorder %s95, %s111
      %p113 = scmp.eq.s32.totalorder %s19, 0
      %p114 = por %p112, %p113
      %p115 = scmp.le.s32.totalorder 1, %s13
      %p116 = scmp.lt.s32.totalorder %s13, 3
      %p117 = pnand %p115, %p116
      %p118 = pneg %p117
      // Predicated region
      $region9: #{tpu_custom_call.1} parent=5 // pred_check
        _
      $region10: #{tpu_custom_call.1} parent=5 // pred_check_branch
        %120 = sbr.rel (%p117) target = $region12
      $region11: #{tpu_custom_call.1} parent=5 // pred_region
        %s121 = ssub.s32 %s13, 1
        // Predicated region
        $region13: #{tpu_custom_call.1} parent=11 // pred_check
          %p122 = pneg %p60
        $region14: #{tpu_custom_call.1} parent=11 // pred_check_branch
          %124 = sbr.rel (%p122) target = $region16
        $region15: #{tpu_custom_call.1} parent=11 // pred_region
          %s126 = ssub.s32 896, 896
          %127 = vsyncadd [#allocation5], %s126
          %s128 = sshll.u32 [#allocation4], 4
          %s129 = int_to_ptr.vmem [resolvable:$true] %s128
          %134 = dma.hbm_to_vmem [thread:$0]  %s1, 896, %s129, [#allocation5], 128, 128, 8
        $region16: #{tpu_custom_call.1} parent=11 // pred_fallthru
          _
        // Predicated region
        $region17: #{tpu_custom_call.1} parent=11 // pred_check
          %p135 = pneg %p81
        $region18: #{tpu_custom_call.1} parent=11 // pred_check_branch
          %137 = sbr.rel (%p135) target = $region20
        $region19: #{tpu_custom_call.1} parent=11 // pred_region
          %s139 = ssub.s32 896, 896
          %140 = vsyncadd [#allocation5], %s139
          %s141 = sshll.u32 [#allocation6], 4
          %s142 = int_to_ptr.vmem [resolvable:$true] %s141
          %147 = dma.hbm_to_vmem [thread:$0]  %s2, 896, %s142, [#allocation5], 128, 128, 8
        $region20: #{tpu_custom_call.1} parent=11 // pred_fallthru
          _
      $region12: #{tpu_custom_call.1} parent=5 // pred_fallthru
        _
      %p148 = scmp.lt.s32.totalorder %s13, 2
      // Predicated region
      $region21: #{tpu_custom_call.1} parent=5 // pred_check
        %p149 = pneg %p148
      $region22: #{tpu_custom_call.1} parent=5 // pred_check_branch
        %151 = sbr.rel (%p149) target = $region24
      $region23: #{tpu_custom_call.1} parent=5 // pred_region
        // Predicated region
        $region25: #{tpu_custom_call.1} parent=23 // pred_check
          %p152 = pneg %p33
        $region26: #{tpu_custom_call.1} parent=23 // pred_check_branch
          %154 = sbr.rel (%p152) target = $region28
        $region27: #{tpu_custom_call.1} parent=23 // pred_region
          %s155 = sand.u32 %s23, 1
          %s156 = scalar_lea.sflag [#allocation3], %s155
          %s157 = sand.u32 %s23, 1
          %s158 = smul.addr %s157, 8
          %s159 = scalar_lea.vmem [#allocation2], %s158
          %s160 = smul.u32 8, %s13
          %s162 = ssub.s32 128, 128
          %163 = vsyncadd %s156, %s162
          %s164 = smul.addr %s160, 16
          %s165 = scalar_lea.hbm %s0, %s164
          %s167 = sshll.u32 %s159, 4
          %s168 = int_to_ptr.vmem [resolvable:$true] %s167
          %170 = dma.hbm_to_vmem [thread:$0]  %s165, 128, %s168, %s156
        $region28: #{tpu_custom_call.1} parent=23 // pred_fallthru
          _
      $region24: #{tpu_custom_call.1} parent=5 // pred_fallthru
        _
      %p171 = scmp.le.s32.totalorder 1, %s13
      %p172 = scmp.lt.s32.totalorder %s13, 3
      %p173 = pnand %p171, %p172
      %p174 = pneg %p173
      // Predicated region
      $region29: #{tpu_custom_call.1} parent=5 // pred_check
        _
      $region30: #{tpu_custom_call.1} parent=5 // pred_check_branch
        %176 = sbr.rel (%p173) target = $region32
      $region31: #{tpu_custom_call.1} parent=5 // pred_region
        %s177 = ssub.s32 %s13, 1
        %s178 = sand.u32 %s26, 1
        %s179 = scalar_lea.sflag [#allocation3], %s178
        %s180 = sand.u32 %s26, 1
        %s181 = smul.addr %s180, 8
        %s182 = scalar_lea.vmem [#allocation2], %s181
        // Predicated region
        $region33: #{tpu_custom_call.1} parent=31 // pred_check
          %p183 = pneg %p39
        $region34: #{tpu_custom_call.1} parent=31 // pred_check_branch
          %185 = sbr.rel (%p183) target = $region36
        $region35: #{tpu_custom_call.1} parent=31 // pred_region
          %186 = dma.done %s179, 128
        $region36: #{tpu_custom_call.1} parent=31 // pred_fallthru
          _
        // Predicated region
        $region37: #{tpu_custom_call.1} parent=31 // pred_check
          %p187 = pneg %p60
        $region38: #{tpu_custom_call.1} parent=31 // pred_check_branch
          %189 = sbr.rel (%p187) target = $region40
        $region39: #{tpu_custom_call.1} parent=31 // pred_region
          %190 = dma.done [#allocation5], 896
        $region40: #{tpu_custom_call.1} parent=31 // pred_fallthru
          _
        // Predicated region
        $region41: #{tpu_custom_call.1} parent=31 // pred_check
          %p191 = pneg %p81
        $region42: #{tpu_custom_call.1} parent=31 // pred_check_branch
          %193 = sbr.rel (%p191) target = $region44
        $region43: #{tpu_custom_call.1} parent=31 // pred_region
          %194 = dma.done [#allocation5], 896
        $region44: #{tpu_custom_call.1} parent=31 // pred_fallthru
          _
        %s195 = sand.u32 %s26, 1
        %s196 = scalar_lea.sflag [#allocation3], %s195
        %s197 = sand.u32 %s26, 1
        %s198 = smul.addr %s197, 8
        %s199 = scalar_lea.vmem [#allocation2], %s198
        %p200 = pneg %p39
        %p201 = pneg %p36
        %p202 = pneg %p60
        %p203 = pneg %p57
        %p204 = pneg %p81
        %p205 = pneg %p78
        %p206 = pneg %p107
        %p207 = pneg %p104
        %s208 = smul.u32 128, %s18
        %p209 = scmp.lt.s32.totalorder %s208, 255
        %s210 = scalar_select %p209, %s208, 255
        %s211 = smul.addr %s210, 8
        %s212 = scalar_lea.vmem %s3, %s211
        %s213 = smul.u32 8, %s18
        %s214 = smul.u32 128, %s18
        %p215 = scmp.lt.s32.totalorder %s214, 255
        %s216 = scalar_select %p215, %s214, 255
        %s217 = smul.addr %s216, 8
        %s218 = scalar_lea.vmem %s3, %s217
        %s219 = smul.u32 128, %s18
        %v220 = vld [vmem:[%s182] sm:$0xff]
        %v221 = vld [vmem:[#allocation4] sm:$0xff]
        %v222 = vld [vmem:[#allocation4 + $0x8] sm:$0xff]
        %v223 = vld [vmem:[#allocation4 + $0x10] sm:$0xff]
        %v224 = vld [vmem:[#allocation4 + $0x18] sm:$0xff]
        %v225 = vld [vmem:[#allocation4 + $0x20] sm:$0xff]
        %v226 = vld [vmem:[#allocation4 + $0x28] sm:$0xff]
        %v227 = vld [vmem:[#allocation4 + $0x30] sm:$0x3]
        %v228 = vld [vmem:[#allocation6] sm:$0xff]
        %v229 = vld [vmem:[#allocation6 + $0x8] sm:$0xff]
        %v230 = vld [vmem:[#allocation6 + $0x10] sm:$0xff]
        %v231 = vld [vmem:[#allocation6 + $0x18] sm:$0xff]
        %v232 = vld [vmem:[#allocation6 + $0x20] sm:$0xff]
        %v233 = vld [vmem:[#allocation6 + $0x28] sm:$0xff]
        %v234 = vld [vmem:[#allocation6 + $0x30] sm:$0x3]
        %v235 = vmul.f32 %v220, 0.62831855
        %v236 = vand.u32 2147483647, %v235
        %vm237 = vcmp.le.f32.partialorder %v236, 0.7853982
        %vm238 = vcmp.lt.s32.totalorder %v235, 0
        %v239 = vand.u32 %v235, 2139095040
        %v240 = vshrl.u32 %v239, 23
        %v241 = vsub.s32 %v240, 127
        %v242 = vand.u32 2147483647, %v235
        %v243 = vand.u32 %v242, 8388607
        %v244 = vor.u32 %v243, 8388608
        %v245 = vsub.s32 0, %v244
        %v246 = vadd.s32 %v241, 1
        %vm247 = vcmp.gt.s32.totalorder %v246, 0
        %v248 = vsel %vm247, %v246, 0
        %v249 = vshrl.u32 %v248, 5
        %v250 = vand.u32 %v248, 31
        %v251 = vsub.s32 32, %v250
        %v252 = vshrl.u32 683565275, %v251
        %v253 = vshll.u32 683565275, %v250
        %v254 = vshrl.u32 2475754826, %v251
        %v255 = vor.u32 %v253, %v254
        %v256 = vshll.u32 2475754826, %v250
        %v257 = vshrl.u32 2131351028, %v251
        %v258 = vor.u32 %v256, %v257
        %v259 = vshll.u32 2131351028, %v250
        %v260 = vshrl.u32 2102212464, %v251
        %v261 = vor.u32 %v259, %v260
        %v262 = vshll.u32 2102212464, %v250
        %v263 = vshrl.u32 920167782, %v251
        %v264 = vor.u32 %v262, %v263
        %v265 = vshll.u32 920167782, %v250
        %v266 = vshrl.u32 1326507024, %v251
        %v267 = vor.u32 %v265, %v266
        %vm268 = vcmp.lt.s32.totalorder %v249, 1
        %vm269 = vcmp.lt.s32.totalorder %v249, 2
        %vm270 = vcmp.lt.s32.totalorder %v249, 3
        %vm271 = vcmp.lt.s32.totalorder %v249, 4
        %v272 = vsel %vm268, %v252, %v255
        %v273 = vsel %vm271, %v261, 2102212464
        %v274 = vsel %vm270, %v258, %v273
        %v275 = vsel %vm269, %v272, %v274
        %v276 = vsel %vm268, %v255, %v258
        %v277 = vsel %vm271, %v264, 920167782
        %v278 = vsel %vm270, %v261, %v277
        %v279 = vsel %vm269, %v276, %v278
        %v280 = vsel %vm268, %v258, %v261
        %v281 = vsel %vm271, %v267, 1326507024
        %v282 = vsel %vm270, %v264, %v281
        %v283 = vsel %vm269, %v280, %v282
        %v284 = vshll.u32 %v244, 8
        %v285 = vmul.u32.u64.compose %v284, %v283
        %v286 = vextract.low.u32 %v285
        %v287 = vextract.high.u32 %v285
        %v288 = vmul.u32.u64.compose %v284, %v279
        %v289 = vextract.low.u32 %v288
        %v290 = vextract.high.u32 %v288
        %v291 = vmul.u32 %v284, %v275
        %v292 = vadd.s32 %v287, %v289
        %vm293 = vc.u32 %v287, %v289
        %v294 = vadd.s32 %v290, 1
        %v295 = vsel %vm293, %v294, %v290
        %v296 = vadd.s32 %v291, %v295
        %v297 = vadd.s32 %v296, 536870912
        %v298 = vshrl.u32 %v297, 30
        %v299 = vshll.u32 %v298, 30
        %v300 = vsub.s32 %v296, %v299
        %vm301 = vcmp.lt.s32.totalorder %v300, 0
        %v302 = vsub.s32 0, %v300
        %v303 = vsel %vm301, %v302, %v300
        %v304 = vclz %v303
        %v305 = vsub.s32 %v304, 2
        %vm306 = vcmp.gt.s32.totalorder 0, %v305
        %v307 = vsel %vm306, 0, %v305
        %v308 = vsub.s32 32, %v307
        %v309 = vshll.u32 %v300, %v307
        %v310 = vshrl.u32 %v292, %v308
        %v311 = vor.u32 %v309, %v310
        %v312 = vsub.s32 4294967266, %v307
        %v313 = vadd.s32 %v312, 127
        %v314 = vshll.u32 %v313, 23
        %v315 = vor.u32 4788187, %v314
        %v316 = vand.u32 2147483647, %v315
        %v318 = vcvt.s32.f32 %v311
        %v319 = vmul.f32 %v318, %v316
        %v320 = vxor.u32 %v319, 2147483648
        %v321 = vsel %vm238, %v320, %v319
        %v322 = vsub.s32 4, %v298
        %v323 = vsel %vm238, %v322, %v298
        %v324 = vsel %vm237, %v235, %v321
        %v325 = vsel %vm237, 0, %v323
        %v326 = vcosq.f32.pop %v324
        %v327 = vsinq.f32.pop %v324
        %vm328 = vweird.f32 %v235
        %v329 = vand.u32 %v325, 3
        %vm330 = vcmp.lt.s32.totalorder %v329, 2
        %vm331 = vcmp.eq.s32.totalorder %v329, 0
        %v332 = vxor.u32 %v327, 2147483648
        %v333 = vsel %vm331, %v326, %v332
        %vm334 = vcmp.eq.s32.totalorder %v329, 2
        %v335 = vxor.u32 %v326, 2147483648
        %v336 = vsel %vm334, %v335, %v327
        %v337 = vsel %vm330, %v333, %v336
        %v338 = vsel %vm328, nan, %v337
        %v339 = vadd.f32 %v338, 1.0
        %v340 = vmul.f32 %v339, 0.5
        %vm341 = vcmp.lt.f32.partialorder %v220, 5.0
        %v342 = vsel %vm341, 1, 0
        %v343 = vcvt.s32.f32 %v342
        %v344 = vmul.f32 %v340, %v343
        %v345 = vsub.f32 0.0, %v220
        %v346 = vmul.f32 %v345, 1.442695
        %v347 = vpow.pop %v346
        %v349 = vlaneseq
        %v350 = vshrl.u32 %v349, 7
        %v351 = vsub.s32 0, %v350
        %v352 = vrot.slane %v347, %v351
        %v353 = vlaneseq
        %v354 = vshrl.u32 %v353, 7
        %v355 = vsub.s32 1, %v354
        %v356 = vrot.slane %v347, %v355
        %v357 = vlaneseq
        %v358 = vshrl.u32 %v357, 7
        %v359 = vsub.s32 2, %v358
        %v360 = vrot.slane %v347, %v359
        %v361 = vlaneseq
        %v362 = vshrl.u32 %v361, 7
        %v363 = vsub.s32 3, %v362
        %v364 = vrot.slane %v347, %v363
        %v365 = vlaneseq
        %v366 = vshrl.u32 %v365, 7
        %v367 = vsub.s32 4, %v366
        %v368 = vrot.slane %v347, %v367
        %v369 = vlaneseq
        %v370 = vshrl.u32 %v369, 7
        %v371 = vsub.s32 5, %v370
        %v372 = vrot.slane %v347, %v371
        %v373 = vlaneseq
        %v374 = vshrl.u32 %v373, 7
        %v375 = vsub.s32 6, %v374
        %v376 = vrot.slane %v347, %v375
        %v377 = vlaneseq
        %v378 = vshrl.u32 %v377, 7
        %v379 = vsub.s32 7, %v378
        %v380 = vrot.slane %v347, %v379
        %390 = vset.pattern.permute.xlu0 0
        %391 = vperm.xlu0 %390, %v221
        %v392 = vpop.permute.xlu0 %391
        %395 = vset.pattern.permute.xlu0 0
        %396 = vperm.xlu0 %395, %v222
        %v397 = vpop.permute.xlu0 %396
        %400 = vset.pattern.permute.xlu0 0
        %401 = vperm.xlu0 %400, %v223
        %v402 = vpop.permute.xlu0 %401
        %405 = vset.pattern.permute.xlu0 0
        %406 = vperm.xlu0 %405, %v224
        %v407 = vpop.permute.xlu0 %406
        %410 = vset.pattern.permute.xlu0 0
        %411 = vperm.xlu0 %410, %v225
        %v412 = vpop.permute.xlu0 %411
        %415 = vset.pattern.permute.xlu0 0
        %416 = vperm.xlu0 %415, %v226
        %v417 = vpop.permute.xlu0 %416
        %420 = vset.pattern.permute.xlu0 0
        %421 = vperm.xlu0 %420, %v227
        %v422 = vpop.permute.xlu0 %421
        %v424 = vsub.f32 %v352, %v392
        %v425 = vsub.f32 %v356, %v392
        %v426 = vsub.f32 %v360, %v392
        %v427 = vsub.f32 %v364, %v392
        %v428 = vsub.f32 %v368, %v392
        %v429 = vsub.f32 %v372, %v392
        %v430 = vsub.f32 %v376, %v392
        %v431 = vsub.f32 %v380, %v392
        %v432 = vsub.f32 %v352, %v397
        %v433 = vsub.f32 %v356, %v397
        %v434 = vsub.f32 %v360, %v397
        %v435 = vsub.f32 %v364, %v397
        %v436 = vsub.f32 %v368, %v397
        %v437 = vsub.f32 %v372, %v397
        %v438 = vsub.f32 %v376, %v397
        %v439 = vsub.f32 %v380, %v397
        %v440 = vsub.f32 %v352, %v402
        %v441 = vsub.f32 %v356, %v402
        %v442 = vsub.f32 %v360, %v402
        %v443 = vsub.f32 %v364, %v402
        %v444 = vsub.f32 %v368, %v402
        %v445 = vsub.f32 %v372, %v402
        %v446 = vsub.f32 %v376, %v402
        %v447 = vsub.f32 %v380, %v402
        %v448 = vsub.f32 %v352, %v407
        %v449 = vsub.f32 %v356, %v407
        %v450 = vsub.f32 %v360, %v407
        %v451 = vsub.f32 %v364, %v407
        %v452 = vsub.f32 %v368, %v407
        %v453 = vsub.f32 %v372, %v407
        %v454 = vsub.f32 %v376, %v407
        %v455 = vsub.f32 %v380, %v407
        %v456 = vsub.f32 %v352, %v412
        %v457 = vsub.f32 %v356, %v412
        %v458 = vsub.f32 %v360, %v412
        %v459 = vsub.f32 %v364, %v412
        %v460 = vsub.f32 %v368, %v412
        %v461 = vsub.f32 %v372, %v412
        %v462 = vsub.f32 %v376, %v412
        %v463 = vsub.f32 %v380, %v412
        %v464 = vsub.f32 %v352, %v417
        %v465 = vsub.f32 %v356, %v417
        %v466 = vsub.f32 %v360, %v417
        %v467 = vsub.f32 %v364, %v417
        %v468 = vsub.f32 %v368, %v417
        %v469 = vsub.f32 %v372, %v417
        %v470 = vsub.f32 %v376, %v417
        %v471 = vsub.f32 %v380, %v417
        %v472 = vsub.f32 %v352, %v422
        %v473 = vsub.f32 %v356, %v422
        %v474 = vsub.f32 %v360, %v422
        %v475 = vsub.f32 %v364, %v422
        %v476 = vsub.f32 %v368, %v422
        %v477 = vsub.f32 %v372, %v422
        %v478 = vsub.f32 %v376, %v422
        %v479 = vsub.f32 %v380, %v422
        %v480 = vsub.f32 0.0, %v228
        %v481 = vsub.f32 0.0, %v229
        %v482 = vsub.f32 0.0, %v230
        %v483 = vsub.f32 0.0, %v231
        %v484 = vsub.f32 0.0, %v232
        %v485 = vsub.f32 0.0, %v233
        %v486 = vsub.f32 0.0, %v234
        %488 = vset.pattern.permute.xlu0 0
        %489 = vperm.xlu0 %488, %v480
        %v490 = vpop.permute.xlu0 %489
        %493 = vset.pattern.permute.xlu0 0
        %494 = vperm.xlu0 %493, %v481
        %v495 = vpop.permute.xlu0 %494
        %498 = vset.pattern.permute.xlu0 0
        %499 = vperm.xlu0 %498, %v482
        %v500 = vpop.permute.xlu0 %499
        %503 = vset.pattern.permute.xlu0 0
        %504 = vperm.xlu0 %503, %v483
        %v505 = vpop.permute.xlu0 %504
        %508 = vset.pattern.permute.xlu0 0
        %509 = vperm.xlu0 %508, %v484
        %v510 = vpop.permute.xlu0 %509
        %513 = vset.pattern.permute.xlu0 0
        %514 = vperm.xlu0 %513, %v485
        %v515 = vpop.permute.xlu0 %514
        %518 = vset.pattern.permute.xlu0 0
        %519 = vperm.xlu0 %518, %v486
        %v520 = vpop.permute.xlu0 %519
        %v522 = vmul.f32 %v490, %v424
        %v523 = vmul.f32 %v490, %v425
        %v524 = vmul.f32 %v490, %v426
        %v525 = vmul.f32 %v490, %v427
        %v526 = vmul.f32 %v490, %v428
        %v527 = vmul.f32 %v490, %v429
        %v528 = vmul.f32 %v490, %v430
        %v529 = vmul.f32 %v490, %v431
        %v530 = vmul.f32 %v495, %v432
        %v531 = vmul.f32 %v495, %v433
        %v532 = vmul.f32 %v495, %v434
        %v533 = vmul.f32 %v495, %v435
        %v534 = vmul.f32 %v495, %v436
        %v535 = vmul.f32 %v495, %v437
        %v536 = vmul.f32 %v495, %v438
        %v537 = vmul.f32 %v495, %v439
        %v538 = vmul.f32 %v500, %v440
        %v539 = vmul.f32 %v500, %v441
        %v540 = vmul.f32 %v500, %v442
        %v541 = vmul.f32 %v500, %v443
        %v542 = vmul.f32 %v500, %v444
        %v543 = vmul.f32 %v500, %v445
        %v544 = vmul.f32 %v500, %v446
        %v545 = vmul.f32 %v500, %v447
        %v546 = vmul.f32 %v505, %v448
        %v547 = vmul.f32 %v505, %v449
        %v548 = vmul.f32 %v505, %v450
        %v549 = vmul.f32 %v505, %v451
        %v550 = vmul.f32 %v505, %v452
        %v551 = vmul.f32 %v505, %v453
        %v552 = vmul.f32 %v505, %v454
        %v553 = vmul.f32 %v505, %v455
        %v554 = vmul.f32 %v510, %v456
        %v555 = vmul.f32 %v510, %v457
        %v556 = vmul.f32 %v510, %v458
        %v557 = vmul.f32 %v510, %v459
        %v558 = vmul.f32 %v510, %v460
        %v559 = vmul.f32 %v510, %v461
        %v560 = vmul.f32 %v510, %v462
        %v561 = vmul.f32 %v510, %v463
        %v562 = vmul.f32 %v515, %v464
        %v563 = vmul.f32 %v515, %v465
        %v564 = vmul.f32 %v515, %v466
        %v565 = vmul.f32 %v515, %v467
        %v566 = vmul.f32 %v515, %v468
        %v567 = vmul.f32 %v515, %v469
        %v568 = vmul.f32 %v515, %v470
        %v569 = vmul.f32 %v515, %v471
        %v570 = vmul.f32 %v520, %v472
        %v571 = vmul.f32 %v520, %v473
        %v572 = vmul.f32 %v520, %v474
        %v573 = vmul.f32 %v520, %v475
        %v574 = vmul.f32 %v520, %v476
        %v575 = vmul.f32 %v520, %v477
        %v576 = vmul.f32 %v520, %v478
        %v577 = vmul.f32 %v520, %v479
        %v578 = vmul.f32 %v522, %v424
        %v579 = vmul.f32 %v523, %v425
        %v580 = vmul.f32 %v524, %v426
        %v581 = vmul.f32 %v525, %v427
        %v582 = vmul.f32 %v526, %v428
        %v583 = vmul.f32 %v527, %v429
        %v584 = vmul.f32 %v528, %v430
        %v585 = vmul.f32 %v529, %v431
        %v586 = vmul.f32 %v530, %v432
        %v587 = vmul.f32 %v531, %v433
        %v588 = vmul.f32 %v532, %v434
        %v589 = vmul.f32 %v533, %v435
        %v590 = vmul.f32 %v534, %v436
        %v591 = vmul.f32 %v535, %v437
        %v592 = vmul.f32 %v536, %v438
        %v593 = vmul.f32 %v537, %v439
        %v594 = vmul.f32 %v538, %v440
        %v595 = vmul.f32 %v539, %v441
        %v596 = vmul.f32 %v540, %v442
        %v597 = vmul.f32 %v541, %v443
        %v598 = vmul.f32 %v542, %v444
        %v599 = vmul.f32 %v543, %v445
        %v600 = vmul.f32 %v544, %v446
        %v601 = vmul.f32 %v545, %v447
        %v602 = vmul.f32 %v546, %v448
        %v603 = vmul.f32 %v547, %v449
        %v604 = vmul.f32 %v548, %v450
        %v605 = vmul.f32 %v549, %v451
        %v606 = vmul.f32 %v550, %v452
        %v607 = vmul.f32 %v551, %v453
        %v608 = vmul.f32 %v552, %v454
        %v609 = vmul.f32 %v553, %v455
        %v610 = vmul.f32 %v554, %v456
        %v611 = vmul.f32 %v555, %v457
        %v612 = vmul.f32 %v556, %v458
        %v613 = vmul.f32 %v557, %v459
        %v614 = vmul.f32 %v558, %v460
        %v615 = vmul.f32 %v559, %v461
        %v616 = vmul.f32 %v560, %v462
        %v617 = vmul.f32 %v561, %v463
        %v618 = vmul.f32 %v562, %v464
        %v619 = vmul.f32 %v563, %v465
        %v620 = vmul.f32 %v564, %v466
        %v621 = vmul.f32 %v565, %v467
        %v622 = vmul.f32 %v566, %v468
        %v623 = vmul.f32 %v567, %v469
        %v624 = vmul.f32 %v568, %v470
        %v625 = vmul.f32 %v569, %v471
        %v626 = vmul.f32 %v570, %v472
        %v627 = vmul.f32 %v571, %v473
        %v628 = vmul.f32 %v572, %v474
        %v629 = vmul.f32 %v573, %v475
        %v630 = vmul.f32 %v574, %v476
        %v631 = vmul.f32 %v575, %v477
        %v632 = vmul.f32 %v576, %v478
        %v633 = vmul.f32 %v577, %v479
        %v634 = vmul.f32 %v578, 1.442695
        %v635 = vpow.pop %v634
        %v636 = vmul.f32 %v579, 1.442695
        %v637 = vpow.pop %v636
        %v638 = vmul.f32 %v580, 1.442695
        %v639 = vpow.pop %v638
        %v640 = vmul.f32 %v581, 1.442695
        %v641 = vpow.pop %v640
        %v642 = vmul.f32 %v582, 1.442695
        %v643 = vpow.pop %v642
        %v644 = vmul.f32 %v583, 1.442695
        %v645 = vpow.pop %v644
        %v646 = vmul.f32 %v584, 1.442695
        %v647 = vpow.pop %v646
        %v648 = vmul.f32 %v585, 1.442695
        %v649 = vpow.pop %v648
        %v650 = vmul.f32 %v586, 1.442695
        %v651 = vpow.pop %v650
        %v652 = vmul.f32 %v587, 1.442695
        %v653 = vpow.pop %v652
        %v654 = vmul.f32 %v588, 1.442695
        %v655 = vpow.pop %v654
        %v656 = vmul.f32 %v589, 1.442695
        %v657 = vpow.pop %v656
        %v658 = vmul.f32 %v590, 1.442695
        %v659 = vpow.pop %v658
        %v660 = vmul.f32 %v591, 1.442695
        %v661 = vpow.pop %v660
        %v662 = vmul.f32 %v592, 1.442695
        %v663 = vpow.pop %v662
        %v664 = vmul.f32 %v593, 1.442695
        %v665 = vpow.pop %v664
        %v666 = vmul.f32 %v594, 1.442695
        %v667 = vpow.pop %v666
        %v668 = vmul.f32 %v595, 1.442695
        %v669 = vpow.pop %v668
        %v670 = vmul.f32 %v596, 1.442695
        %v671 = vpow.pop %v670
        %v672 = vmul.f32 %v597, 1.442695
        %v673 = vpow.pop %v672
        %v674 = vmul.f32 %v598, 1.442695
        %v675 = vpow.pop %v674
        %v676 = vmul.f32 %v599, 1.442695
        %v677 = vpow.pop %v676
        %v678 = vmul.f32 %v600, 1.442695
        %v679 = vpow.pop %v678
        %v680 = vmul.f32 %v601, 1.442695
        %v681 = vpow.pop %v680
        %v682 = vmul.f32 %v602, 1.442695
        %v683 = vpow.pop %v682
        %v684 = vmul.f32 %v603, 1.442695
        %v685 = vpow.pop %v684
        %v686 = vmul.f32 %v604, 1.442695
        %v687 = vpow.pop %v686
        %v688 = vmul.f32 %v605, 1.442695
        %v689 = vpow.pop %v688
        %v690 = vmul.f32 %v606, 1.442695
        %v691 = vpow.pop %v690
        %v692 = vmul.f32 %v607, 1.442695
        %v693 = vpow.pop %v692
        %v694 = vmul.f32 %v608, 1.442695
        %v695 = vpow.pop %v694
        %v696 = vmul.f32 %v609, 1.442695
        %v697 = vpow.pop %v696
        %v698 = vmul.f32 %v610, 1.442695
        %v699 = vpow.pop %v698
        %v700 = vmul.f32 %v611, 1.442695
        %v701 = vpow.pop %v700
        %v702 = vmul.f32 %v612, 1.442695
        %v703 = vpow.pop %v702
        %v704 = vmul.f32 %v613, 1.442695
        %v705 = vpow.pop %v704
        %v706 = vmul.f32 %v614, 1.442695
        %v707 = vpow.pop %v706
        %v708 = vmul.f32 %v615, 1.442695
        %v709 = vpow.pop %v708
        %v710 = vmul.f32 %v616, 1.442695
        %v711 = vpow.pop %v710
        %v712 = vmul.f32 %v617, 1.442695
        %v713 = vpow.pop %v712
        %v714 = vmul.f32 %v618, 1.442695
        %v715 = vpow.pop %v714
        %v716 = vmul.f32 %v619, 1.442695
        %v717 = vpow.pop %v716
        %v718 = vmul.f32 %v620, 1.442695
        %v719 = vpow.pop %v718
        %v720 = vmul.f32 %v621, 1.442695
        %v721 = vpow.pop %v720
        %v722 = vmul.f32 %v622, 1.442695
        %v723 = vpow.pop %v722
        %v724 = vmul.f32 %v623, 1.442695
        %v725 = vpow.pop %v724
        %v726 = vmul.f32 %v624, 1.442695
        %v727 = vpow.pop %v726
        %v728 = vmul.f32 %v625, 1.442695
        %v729 = vpow.pop %v728
        %v730 = vmul.f32 %v626, 1.442695
        %v731 = vpow.pop %v730
        %v732 = vmul.f32 %v627, 1.442695
        %v733 = vpow.pop %v732
        %v734 = vmul.f32 %v628, 1.442695
        %v735 = vpow.pop %v734
        %v736 = vmul.f32 %v629, 1.442695
        %v737 = vpow.pop %v736
        %v738 = vmul.f32 %v630, 1.442695
        %v739 = vpow.pop %v738
        %v740 = vmul.f32 %v631, 1.442695
        %v741 = vpow.pop %v740
        %v742 = vmul.f32 %v632, 1.442695
        %v743 = vpow.pop %v742
        %v744 = vmul.f32 %v633, 1.442695
        %v745 = vpow.pop %v744
        %v747 = vlaneseq
        %v748 = vshrl.u32 %v747, 7
        %v749 = vsub.s32 0, %v748
        %v750 = vrot.slane %v344, %v749
        %v751 = vlaneseq
        %v752 = vshrl.u32 %v751, 7
        %v753 = vsub.s32 1, %v752
        %v754 = vrot.slane %v344, %v753
        %v755 = vlaneseq
        %v756 = vshrl.u32 %v755, 7
        %v757 = vsub.s32 2, %v756
        %v758 = vrot.slane %v344, %v757
        %v759 = vlaneseq
        %v760 = vshrl.u32 %v759, 7
        %v761 = vsub.s32 3, %v760
        %v762 = vrot.slane %v344, %v761
        %v763 = vlaneseq
        %v764 = vshrl.u32 %v763, 7
        %v765 = vsub.s32 4, %v764
        %v766 = vrot.slane %v344, %v765
        %v767 = vlaneseq
        %v768 = vshrl.u32 %v767, 7
        %v769 = vsub.s32 5, %v768
        %v770 = vrot.slane %v344, %v769
        %v771 = vlaneseq
        %v772 = vshrl.u32 %v771, 7
        %v773 = vsub.s32 6, %v772
        %v774 = vrot.slane %v344, %v773
        %v775 = vlaneseq
        %v776 = vshrl.u32 %v775, 7
        %v777 = vsub.s32 7, %v776
        %v778 = vrot.slane %v344, %v777
        %v787 = vmul.f32 %v750, %v635
        %v788 = vmul.f32 %v754, %v637
        %v789 = vmul.f32 %v758, %v639
        %v790 = vmul.f32 %v762, %v641
        %v791 = vmul.f32 %v766, %v643
        %v792 = vmul.f32 %v770, %v645
        %v793 = vmul.f32 %v774, %v647
        %v794 = vmul.f32 %v778, %v649
        %v795 = vmul.f32 %v750, %v651
        %v796 = vmul.f32 %v754, %v653
        %v797 = vmul.f32 %v758, %v655
        %v798 = vmul.f32 %v762, %v657
        %v799 = vmul.f32 %v766, %v659
        %v800 = vmul.f32 %v770, %v661
        %v801 = vmul.f32 %v774, %v663
        %v802 = vmul.f32 %v778, %v665
        %v803 = vmul.f32 %v750, %v667
        %v804 = vmul.f32 %v754, %v669
        %v805 = vmul.f32 %v758, %v671
        %v806 = vmul.f32 %v762, %v673
        %v807 = vmul.f32 %v766, %v675
        %v808 = vmul.f32 %v770, %v677
        %v809 = vmul.f32 %v774, %v679
        %v810 = vmul.f32 %v778, %v681
        %v811 = vmul.f32 %v750, %v683
        %v812 = vmul.f32 %v754, %v685
        %v813 = vmul.f32 %v758, %v687
        %v814 = vmul.f32 %v762, %v689
        %v815 = vmul.f32 %v766, %v691
        %v816 = vmul.f32 %v770, %v693
        %v817 = vmul.f32 %v774, %v695
        %v818 = vmul.f32 %v778, %v697
        %v819 = vmul.f32 %v750, %v699
        %v820 = vmul.f32 %v754, %v701
        %v821 = vmul.f32 %v758, %v703
        %v822 = vmul.f32 %v762, %v705
        %v823 = vmul.f32 %v766, %v707
        %v824 = vmul.f32 %v770, %v709
        %v825 = vmul.f32 %v774, %v711
        %v826 = vmul.f32 %v778, %v713
        %v827 = vmul.f32 %v750, %v715
        %v828 = vmul.f32 %v754, %v717
        %v829 = vmul.f32 %v758, %v719
        %v830 = vmul.f32 %v762, %v721
        %v831 = vmul.f32 %v766, %v723
        %v832 = vmul.f32 %v770, %v725
        %v833 = vmul.f32 %v774, %v727
        %v834 = vmul.f32 %v778, %v729
        %v835 = vmul.f32 %v750, %v731
        %v836 = vmul.f32 %v754, %v733
        %v837 = vmul.f32 %v758, %v735
        %v838 = vmul.f32 %v762, %v737
        %v839 = vmul.f32 %v766, %v739
        %v840 = vmul.f32 %v770, %v741
        %v841 = vmul.f32 %v774, %v743
        %v842 = vmul.f32 %v778, %v745
        %843 = vxpose.xlu0.b32.start [1/16] %v787, 128
        %844 = vxpose.xlu0.b32.cont [2/16] %v795, 128
        %845 = vxpose.xlu0.b32.cont [3/16] %v803, 128
        %846 = vxpose.xlu0.b32.cont [4/16] %v811, 128
        %847 = vxpose.xlu0.b32.cont [5/16] %v819, 128
        %848 = vxpose.xlu0.b32.cont [6/16] %v827, 128
        %849 = vxpose.xlu0.b32.cont [7/16] %v835, 128
        %850 = vxpose.xlu0.b32.cont [8/16] 0.0, 128
        %851 = vxpose.xlu0.b32.cont [9/16] 0.0, 128
        %852 = vxpose.xlu0.b32.cont [10/16] 0.0, 128
        %853 = vxpose.xlu0.b32.cont [11/16] 0.0, 128
        %854 = vxpose.xlu0.b32.cont [12/16] 0.0, 128
        %855 = vxpose.xlu0.b32.cont [13/16] 0.0, 128
        %856 = vxpose.xlu0.b32.cont [14/16] 0.0, 128
        %857 = vxpose.xlu0.b32.cont [15/16] 0.0, 128
        %858 = vxpose.xlu0.b32.end [16/16] 0.0, 128
        %v859 = vpop.trf.xlu0
        %v860 = vpop.trf.xlu0
        %v861 = vpop.trf.xlu0
        %v862 = vpop.trf.xlu0
        %v863 = vpop.trf.xlu0
        %v864 = vpop.trf.xlu0
        %v865 = vpop.trf.xlu0
        %v866 = vpop.trf.xlu0
        %v867 = vpop.trf.xlu0
        %v868 = vpop.trf.xlu0
        %v869 = vpop.trf.xlu0
        %v870 = vpop.trf.xlu0
        %v871 = vpop.trf.xlu0
        %v872 = vpop.trf.xlu0
        %v873 = vpop.trf.xlu0
        %v874 = vpop.trf.xlu0
        %875 = vxpose.xlu0.b32.start [1/16] %v788, 128
        %876 = vxpose.xlu0.b32.cont [2/16] %v796, 128
        %877 = vxpose.xlu0.b32.cont [3/16] %v804, 128
        %878 = vxpose.xlu0.b32.cont [4/16] %v812, 128
        %879 = vxpose.xlu0.b32.cont [5/16] %v820, 128
        %880 = vxpose.xlu0.b32.cont [6/16] %v828, 128
        %881 = vxpose.xlu0.b32.cont [7/16] %v836, 128
        %882 = vxpose.xlu0.b32.cont [8/16] 0.0, 128
        %883 = vxpose.xlu0.b32.cont [9/16] 0.0, 128
        %884 = vxpose.xlu0.b32.cont [10/16] 0.0, 128
        %885 = vxpose.xlu0.b32.cont [11/16] 0.0, 128
        %886 = vxpose.xlu0.b32.cont [12/16] 0.0, 128
        %887 = vxpose.xlu0.b32.cont [13/16] 0.0, 128
        %888 = vxpose.xlu0.b32.cont [14/16] 0.0, 128
        %889 = vxpose.xlu0.b32.cont [15/16] 0.0, 128
        %890 = vxpose.xlu0.b32.end [16/16] 0.0, 128
        %v891 = vpop.trf.xlu0
        %v892 = vpop.trf.xlu0
        %v893 = vpop.trf.xlu0
        %v894 = vpop.trf.xlu0
        %v895 = vpop.trf.xlu0
        %v896 = vpop.trf.xlu0
        %v897 = vpop.trf.xlu0
        %v898 = vpop.trf.xlu0
        %v899 = vpop.trf.xlu0
        %v900 = vpop.trf.xlu0
        %v901 = vpop.trf.xlu0
        %v902 = vpop.trf.xlu0
        %v903 = vpop.trf.xlu0
        %v904 = vpop.trf.xlu0
        %v905 = vpop.trf.xlu0
        %v906 = vpop.trf.xlu0
        %907 = vxpose.xlu0.b32.start [1/16] %v789, 128
        %908 = vxpose.xlu0.b32.cont [2/16] %v797, 128
        %909 = vxpose.xlu0.b32.cont [3/16] %v805, 128
        %910 = vxpose.xlu0.b32.cont [4/16] %v813, 128
        %911 = vxpose.xlu0.b32.cont [5/16] %v821, 128
        %912 = vxpose.xlu0.b32.cont [6/16] %v829, 128
        %913 = vxpose.xlu0.b32.cont [7/16] %v837, 128
        %914 = vxpose.xlu0.b32.cont [8/16] 0.0, 128
        %915 = vxpose.xlu0.b32.cont [9/16] 0.0, 128
        %916 = vxpose.xlu0.b32.cont [10/16] 0.0, 128
        %917 = vxpose.xlu0.b32.cont [11/16] 0.0, 128
        %918 = vxpose.xlu0.b32.cont [12/16] 0.0, 128
        %919 = vxpose.xlu0.b32.cont [13/16] 0.0, 128
        %920 = vxpose.xlu0.b32.cont [14/16] 0.0, 128
        %921 = vxpose.xlu0.b32.cont [15/16] 0.0, 128
        %922 = vxpose.xlu0.b32.end [16/16] 0.0, 128
        %v923 = vpop.trf.xlu0
        %v924 = vpop.trf.xlu0
        %v925 = vpop.trf.xlu0
        %v926 = vpop.trf.xlu0
        %v927 = vpop.trf.xlu0
        %v928 = vpop.trf.xlu0
        %v929 = vpop.trf.xlu0
        %v930 = vpop.trf.xlu0
        %v931 = vpop.trf.xlu0
        %v932 = vpop.trf.xlu0
        %v933 = vpop.trf.xlu0
        %v934 = vpop.trf.xlu0
        %v935 = vpop.trf.xlu0
        %v936 = vpop.trf.xlu0
        %v937 = vpop.trf.xlu0
        %v938 = vpop.trf.xlu0
        %939 = vxpose.xlu0.b32.start [1/16] %v790, 128
        %940 = vxpose.xlu0.b32.cont [2/16] %v798, 128
        %941 = vxpose.xlu0.b32.cont [3/16] %v806, 128
        %942 = vxpose.xlu0.b32.cont [4/16] %v814, 128
        %943 = vxpose.xlu0.b32.cont [5/16] %v822, 128
        %944 = vxpose.xlu0.b32.cont [6/16] %v830, 128
        %945 = vxpose.xlu0.b32.cont [7/16] %v838, 128
        %946 = vxpose.xlu0.b32.cont [8/16] 0.0, 128
        %947 = vxpose.xlu0.b32.cont [9/16] 0.0, 128
        %948 = vxpose.xlu0.b32.cont [10/16] 0.0, 128
        %949 = vxpose.xlu0.b32.cont [11/16] 0.0, 128
        %950 = vxpose.xlu0.b32.cont [12/16] 0.0, 128
        %951 = vxpose.xlu0.b32.cont [13/16] 0.0, 128
        %952 = vxpose.xlu0.b32.cont [14/16] 0.0, 128
        %953 = vxpose.xlu0.b32.cont [15/16] 0.0, 128
        %954 = vxpose.xlu0.b32.end [16/16] 0.0, 128
        %v955 = vpop.trf.xlu0
        %v956 = vpop.trf.xlu0
        %v957 = vpop.trf.xlu0
        %v958 = vpop.trf.xlu0
        %v959 = vpop.trf.xlu0
        %v960 = vpop.trf.xlu0
        %v961 = vpop.trf.xlu0
        %v962 = vpop.trf.xlu0
        %v963 = vpop.trf.xlu0
        %v964 = vpop.trf.xlu0
        %v965 = vpop.trf.xlu0
        %v966 = vpop.trf.xlu0
        %v967 = vpop.trf.xlu0
        %v968 = vpop.trf.xlu0
        %v969 = vpop.trf.xlu0
        %v970 = vpop.trf.xlu0
        %971 = vxpose.xlu0.b32.start [1/16] %v791, 128
        %972 = vxpose.xlu0.b32.cont [2/16] %v799, 128
        %973 = vxpose.xlu0.b32.cont [3/16] %v807, 128
        %974 = vxpose.xlu0.b32.cont [4/16] %v815, 128
        %975 = vxpose.xlu0.b32.cont [5/16] %v823, 128
        %976 = vxpose.xlu0.b32.cont [6/16] %v831, 128
        %977 = vxpose.xlu0.b32.cont [7/16] %v839, 128
        %978 = vxpose.xlu0.b32.cont [8/16] 0.0, 128
        %979 = vxpose.xlu0.b32.cont [9/16] 0.0, 128
        %980 = vxpose.xlu0.b32.cont [10/16] 0.0, 128
        %981 = vxpose.xlu0.b32.cont [11/16] 0.0, 128
        %982 = vxpose.xlu0.b32.cont [12/16] 0.0, 128
        %983 = vxpose.xlu0.b32.cont [13/16] 0.0, 128
        %984 = vxpose.xlu0.b32.cont [14/16] 0.0, 128
        %985 = vxpose.xlu0.b32.cont [15/16] 0.0, 128
        %986 = vxpose.xlu0.b32.end [16/16] 0.0, 128
        %v987 = vpop.trf.xlu0
        %v988 = vpop.trf.xlu0
        %v989 = vpop.trf.xlu0
        %v990 = vpop.trf.xlu0
        %v991 = vpop.trf.xlu0
        %v992 = vpop.trf.xlu0
        %v993 = vpop.trf.xlu0
        %v994 = vpop.trf.xlu0
        %v995 = vpop.trf.xlu0
        %v996 = vpop.trf.xlu0
        %v997 = vpop.trf.xlu0
        %v998 = vpop.trf.xlu0
        %v999 = vpop.trf.xlu0
        %v1000 = vpop.trf.xlu0
        %v1001 = vpop.trf.xlu0
        %v1002 = vpop.trf.xlu0
        %1003 = vxpose.xlu0.b32.start [1/16] %v792, 128
        %1004 = vxpose.xlu0.b32.cont [2/16] %v800, 128
        %1005 = vxpose.xlu0.b32.cont [3/16] %v808, 128
        %1006 = vxpose.xlu0.b32.cont [4/16] %v816, 128
        %1007 = vxpose.xlu0.b32.cont [5/16] %v824, 128
        %1008 = vxpose.xlu0.b32.cont [6/16] %v832, 128
        %1009 = vxpose.xlu0.b32.cont [7/16] %v840, 128
        %1010 = vxpose.xlu0.b32.cont [8/16] 0.0, 128
        %1011 = vxpose.xlu0.b32.cont [9/16] 0.0, 128
        %1012 = vxpose.xlu0.b32.cont [10/16] 0.0, 128
        %1013 = vxpose.xlu0.b32.cont [11/16] 0.0, 128
        %1014 = vxpose.xlu0.b32.cont [12/16] 0.0, 128
        %1015 = vxpose.xlu0.b32.cont [13/16] 0.0, 128
        %1016 = vxpose.xlu0.b32.cont [14/16] 0.0, 128
        %1017 = vxpose.xlu0.b32.cont [15/16] 0.0, 128
        %1018 = vxpose.xlu0.b32.end [16/16] 0.0, 128
        %v1019 = vpop.trf.xlu0
        %v1020 = vpop.trf.xlu0
        %v1021 = vpop.trf.xlu0
        %v1022 = vpop.trf.xlu0
        %v1023 = vpop.trf.xlu0
        %v1024 = vpop.trf.xlu0
        %v1025 = vpop.trf.xlu0
        %v1026 = vpop.trf.xlu0
        %v1027 = vpop.trf.xlu0
        %v1028 = vpop.trf.xlu0
        %v1029 = vpop.trf.xlu0
        %v1030 = vpop.trf.xlu0
        %v1031 = vpop.trf.xlu0
        %v1032 = vpop.trf.xlu0
        %v1033 = vpop.trf.xlu0
        %v1034 = vpop.trf.xlu0
        %1035 = vxpose.xlu0.b32.start [1/16] %v793, 128
        %1036 = vxpose.xlu0.b32.cont [2/16] %v801, 128
        %1037 = vxpose.xlu0.b32.cont [3/16] %v809, 128
        %1038 = vxpose.xlu0.b32.cont [4/16] %v817, 128
        %1039 = vxpose.xlu0.b32.cont [5/16] %v825, 128
        %1040 = vxpose.xlu0.b32.cont [6/16] %v833, 128
        %1041 = vxpose.xlu0.b32.cont [7/16] %v841, 128
        %1042 = vxpose.xlu0.b32.cont [8/16] 0.0, 128
        %1043 = vxpose.xlu0.b32.cont [9/16] 0.0, 128
        %1044 = vxpose.xlu0.b32.cont [10/16] 0.0, 128
        %1045 = vxpose.xlu0.b32.cont [11/16] 0.0, 128
        %1046 = vxpose.xlu0.b32.cont [12/16] 0.0, 128
        %1047 = vxpose.xlu0.b32.cont [13/16] 0.0, 128
        %1048 = vxpose.xlu0.b32.cont [14/16] 0.0, 128
        %1049 = vxpose.xlu0.b32.cont [15/16] 0.0, 128
        %1050 = vxpose.xlu0.b32.end [16/16] 0.0, 128
        %v1051 = vpop.trf.xlu0
        %v1052 = vpop.trf.xlu0
        %v1053 = vpop.trf.xlu0
        %v1054 = vpop.trf.xlu0
        %v1055 = vpop.trf.xlu0
        %v1056 = vpop.trf.xlu0
        %v1057 = vpop.trf.xlu0
        %v1058 = vpop.trf.xlu0
        %v1059 = vpop.trf.xlu0
        %v1060 = vpop.trf.xlu0
        %v1061 = vpop.trf.xlu0
        %v1062 = vpop.trf.xlu0
        %v1063 = vpop.trf.xlu0
        %v1064 = vpop.trf.xlu0
        %v1065 = vpop.trf.xlu0
        %v1066 = vpop.trf.xlu0
        %1067 = vxpose.xlu0.b32.start [1/16] %v794, 128
        %1068 = vxpose.xlu0.b32.cont [2/16] %v802, 128
        %1069 = vxpose.xlu0.b32.cont [3/16] %v810, 128
        %1070 = vxpose.xlu0.b32.cont [4/16] %v818, 128
        %1071 = vxpose.xlu0.b32.cont [5/16] %v826, 128
        %1072 = vxpose.xlu0.b32.cont [6/16] %v834, 128
        %1073 = vxpose.xlu0.b32.cont [7/16] %v842, 128
        %1074 = vxpose.xlu0.b32.cont [8/16] 0.0, 128
        %1075 = vxpose.xlu0.b32.cont [9/16] 0.0, 128
        %1076 = vxpose.xlu0.b32.cont [10/16] 0.0, 128
        %1077 = vxpose.xlu0.b32.cont [11/16] 0.0, 128
        %1078 = vxpose.xlu0.b32.cont [12/16] 0.0, 128
        %1079 = vxpose.xlu0.b32.cont [13/16] 0.0, 128
        %1080 = vxpose.xlu0.b32.cont [14/16] 0.0, 128
        %1081 = vxpose.xlu0.b32.cont [15/16] 0.0, 128
        %1082 = vxpose.xlu0.b32.end [16/16] 0.0, 128
        %v1083 = vpop.trf.xlu0
        %v1084 = vpop.trf.xlu0
        %v1085 = vpop.trf.xlu0
        %v1086 = vpop.trf.xlu0
        %v1087 = vpop.trf.xlu0
        %v1088 = vpop.trf.xlu0
        %v1089 = vpop.trf.xlu0
        %v1090 = vpop.trf.xlu0
        %v1091 = vpop.trf.xlu0
        %v1092 = vpop.trf.xlu0
        %v1093 = vpop.trf.xlu0
        %v1094 = vpop.trf.xlu0
        %v1095 = vpop.trf.xlu0
        %v1096 = vpop.trf.xlu0
        %v1097 = vpop.trf.xlu0
        %v1098 = vpop.trf.xlu0
        %vm1099 = vcmask 408576
        %1100 = vst.msk [vmem:[%s218] sm:$0xff] %vm1099, %v859
        %1101 = vst.msk [vmem:[%s218 + $0x8] sm:$0xff] %vm1099, %v860
        %1102 = vst.msk [vmem:[%s218 + $0x10] sm:$0xff] %vm1099, %v861
        %1103 = vst.msk [vmem:[%s218 + $0x18] sm:$0xff] %vm1099, %v862
        %1104 = vst.msk [vmem:[%s218 + $0x20] sm:$0xff] %vm1099, %v863
        %1105 = vst.msk [vmem:[%s218 + $0x28] sm:$0xff] %vm1099, %v864
        %1106 = vst.msk [vmem:[%s218 + $0x30] sm:$0xff] %vm1099, %v865
        %1107 = vst.msk [vmem:[%s218 + $0x38] sm:$0xff] %vm1099, %v866
        %1108 = vst.msk [vmem:[%s218 + $0x40] sm:$0xff] %vm1099, %v867
        %1109 = vst.msk [vmem:[%s218 + $0x48] sm:$0xff] %vm1099, %v868
        %1110 = vst.msk [vmem:[%s218 + $0x50] sm:$0xff] %vm1099, %v869
        %1111 = vst.msk [vmem:[%s218 + $0x58] sm:$0xff] %vm1099, %v870
        %1112 = vst.msk [vmem:[%s218 + $0x60] sm:$0xff] %vm1099, %v871
        %1113 = vst.msk [vmem:[%s218 + $0x68] sm:$0xff] %vm1099, %v872
        %1114 = vst.msk [vmem:[%s218 + $0x70] sm:$0xff] %vm1099, %v873
        %1115 = vst.msk [vmem:[%s218 + $0x78] sm:$0xff] %vm1099, %v874
        %1116 = vst.msk [vmem:[%s218 + $0x80] sm:$0xff] %vm1099, %v891
        %1117 = vst.msk [vmem:[%s218 + $0x88] sm:$0xff] %vm1099, %v892
        %1118 = vst.msk [vmem:[%s218 + $0x90] sm:$0xff] %vm1099, %v893
        %1119 = vst.msk [vmem:[%s218 + $0x98] sm:$0xff] %vm1099, %v894
        %1120 = vst.msk [vmem:[%s218 + $0xa0] sm:$0xff] %vm1099, %v895
        %1121 = vst.msk [vmem:[%s218 + $0xa8] sm:$0xff] %vm1099, %v896
        %1122 = vst.msk [vmem:[%s218 + $0xb0] sm:$0xff] %vm1099, %v897
        %1123 = vst.msk [vmem:[%s218 + $0xb8] sm:$0xff] %vm1099, %v898
        %1124 = vst.msk [vmem:[%s218 + $0xc0] sm:$0xff] %vm1099, %v899
        %1125 = vst.msk [vmem:[%s218 + $0xc8] sm:$0xff] %vm1099, %v900
        %1126 = vst.msk [vmem:[%s218 + $0xd0] sm:$0xff] %vm1099, %v901
        %1127 = vst.msk [vmem:[%s218 + $0xd8] sm:$0xff] %vm1099, %v902
        %1128 = vst.msk [vmem:[%s218 + $0xe0] sm:$0xff] %vm1099, %v903
        %1129 = vst.msk [vmem:[%s218 + $0xe8] sm:$0xff] %vm1099, %v904
        %1130 = vst.msk [vmem:[%s218 + $0xf0] sm:$0xff] %vm1099, %v905
        %1131 = vst.msk [vmem:[%s218 + $0xf8] sm:$0xff] %vm1099, %v906
        %1132 = vst.msk [vmem:[%s218 + $0x100] sm:$0xff] %vm1099, %v923
        %1133 = vst.msk [vmem:[%s218 + $0x108] sm:$0xff] %vm1099, %v924
        %1134 = vst.msk [vmem:[%s218 + $0x110] sm:$0xff] %vm1099, %v925
        %1135 = vst.msk [vmem:[%s218 + $0x118] sm:$0xff] %vm1099, %v926
        %1136 = vst.msk [vmem:[%s218 + $0x120] sm:$0xff] %vm1099, %v927
        %1137 = vst.msk [vmem:[%s218 + $0x128] sm:$0xff] %vm1099, %v928
        %1138 = vst.msk [vmem:[%s218 + $0x130] sm:$0xff] %vm1099, %v929
        %1139 = vst.msk [vmem:[%s218 + $0x138] sm:$0xff] %vm1099, %v930
        %1140 = vst.msk [vmem:[%s218 + $0x140] sm:$0xff] %vm1099, %v931
        %1141 = vst.msk [vmem:[%s218 + $0x148] sm:$0xff] %vm1099, %v932
        %1142 = vst.msk [vmem:[%s218 + $0x150] sm:$0xff] %vm1099, %v933
        %1143 = vst.msk [vmem:[%s218 + $0x158] sm:$0xff] %vm1099, %v934
        %1144 = vst.msk [vmem:[%s218 + $0x160] sm:$0xff] %vm1099, %v935
        %1145 = vst.msk [vmem:[%s218 + $0x168] sm:$0xff] %vm1099, %v936
        %1146 = vst.msk [vmem:[%s218 + $0x170] sm:$0xff] %vm1099, %v937
        %1147 = vst.msk [vmem:[%s218 + $0x178] sm:$0xff] %vm1099, %v938
        %1148 = vst.msk [vmem:[%s218 + $0x180] sm:$0xff] %vm1099, %v955
        %1149 = vst.msk [vmem:[%s218 + $0x188] sm:$0xff] %vm1099, %v956
        %1150 = vst.msk [vmem:[%s218 + $0x190] sm:$0xff] %vm1099, %v957
        %1151 = vst.msk [vmem:[%s218 + $0x198] sm:$0xff] %vm1099, %v958
        %1152 = vst.msk [vmem:[%s218 + $0x1a0] sm:$0xff] %vm1099, %v959
        %1153 = vst.msk [vmem:[%s218 + $0x1a8] sm:$0xff] %vm1099, %v960
        %1154 = vst.msk [vmem:[%s218 + $0x1b0] sm:$0xff] %vm1099, %v961
        %1155 = vst.msk [vmem:[%s218 + $0x1b8] sm:$0xff] %vm1099, %v962
        %1156 = vst.msk [vmem:[%s218 + $0x1c0] sm:$0xff] %vm1099, %v963
        %1157 = vst.msk [vmem:[%s218 + $0x1c8] sm:$0xff] %vm1099, %v964
        %1158 = vst.msk [vmem:[%s218 + $0x1d0] sm:$0xff] %vm1099, %v965
        %1159 = vst.msk [vmem:[%s218 + $0x1d8] sm:$0xff] %vm1099, %v966
        %1160 = vst.msk [vmem:[%s218 + $0x1e0] sm:$0xff] %vm1099, %v967
        %1161 = vst.msk [vmem:[%s218 + $0x1e8] sm:$0xff] %vm1099, %v968
        %1162 = vst.msk [vmem:[%s218 + $0x1f0] sm:$0xff] %vm1099, %v969
        %1163 = vst.msk [vmem:[%s218 + $0x1f8] sm:$0xff] %vm1099, %v970
        %1164 = vst.msk [vmem:[%s218 + $0x200] sm:$0xff] %vm1099, %v987
        %1165 = vst.msk [vmem:[%s218 + $0x208] sm:$0xff] %vm1099, %v988
        %1166 = vst.msk [vmem:[%s218 + $0x210] sm:$0xff] %vm1099, %v989
        %1167 = vst.msk [vmem:[%s218 + $0x218] sm:$0xff] %vm1099, %v990
        %1168 = vst.msk [vmem:[%s218 + $0x220] sm:$0xff] %vm1099, %v991
        %1169 = vst.msk [vmem:[%s218 + $0x228] sm:$0xff] %vm1099, %v992
        %1170 = vst.msk [vmem:[%s218 + $0x230] sm:$0xff] %vm1099, %v993
        %1171 = vst.msk [vmem:[%s218 + $0x238] sm:$0xff] %vm1099, %v994
        %1172 = vst.msk [vmem:[%s218 + $0x240] sm:$0xff] %vm1099, %v995
        %1173 = vst.msk [vmem:[%s218 + $0x248] sm:$0xff] %vm1099, %v996
        %1174 = vst.msk [vmem:[%s218 + $0x250] sm:$0xff] %vm1099, %v997
        %1175 = vst.msk [vmem:[%s218 + $0x258] sm:$0xff] %vm1099, %v998
        %1176 = vst.msk [vmem:[%s218 + $0x260] sm:$0xff] %vm1099, %v999
        %1177 = vst.msk [vmem:[%s218 + $0x268] sm:$0xff] %vm1099, %v1000
        %1178 = vst.msk [vmem:[%s218 + $0x270] sm:$0xff] %vm1099, %v1001
        %1179 = vst.msk [vmem:[%s218 + $0x278] sm:$0xff] %vm1099, %v1002
        %1180 = vst.msk [vmem:[%s218 + $0x280] sm:$0xff] %vm1099, %v1019
        %1181 = vst.msk [vmem:[%s218 + $0x288] sm:$0xff] %vm1099, %v1020
        %1182 = vst.msk [vmem:[%s218 + $0x290] sm:$0xff] %vm1099, %v1021
        %1183 = vst.msk [vmem:[%s218 + $0x298] sm:$0xff] %vm1099, %v1022
        %1184 = vst.msk [vmem:[%s218 + $0x2a0] sm:$0xff] %vm1099, %v1023
        %1185 = vst.msk [vmem:[%s218 + $0x2a8] sm:$0xff] %vm1099, %v1024
        %1186 = vst.msk [vmem:[%s218 + $0x2b0] sm:$0xff] %vm1099, %v1025
        %1187 = vst.msk [vmem:[%s218 + $0x2b8] sm:$0xff] %vm1099, %v1026
        %1188 = vst.msk [vmem:[%s218 + $0x2c0] sm:$0xff] %vm1099, %v1027
        %1189 = vst.msk [vmem:[%s218 + $0x2c8] sm:$0xff] %vm1099, %v1028
        %1190 = vst.msk [vmem:[%s218 + $0x2d0] sm:$0xff] %vm1099, %v1029
        %1191 = vst.msk [vmem:[%s218 + $0x2d8] sm:$0xff] %vm1099, %v1030
        %1192 = vst.msk [vmem:[%s218 + $0x2e0] sm:$0xff] %vm1099, %v1031
        %1193 = vst.msk [vmem:[%s218 + $0x2e8] sm:$0xff] %vm1099, %v1032
        %1194 = vst.msk [vmem:[%s218 + $0x2f0] sm:$0xff] %vm1099, %v1033
        %1195 = vst.msk [vmem:[%s218 + $0x2f8] sm:$0xff] %vm1099, %v1034
        %1196 = vst.msk [vmem:[%s218 + $0x300] sm:$0xff] %vm1099, %v1051
        %1197 = vst.msk [vmem:[%s218 + $0x308] sm:$0xff] %vm1099, %v1052
        %1198 = vst.msk [vmem:[%s218 + $0x310] sm:$0xff] %vm1099, %v1053
        %1199 = vst.msk [vmem:[%s218 + $0x318] sm:$0xff] %vm1099, %v1054
        %1200 = vst.msk [vmem:[%s218 + $0x320] sm:$0xff] %vm1099, %v1055
        %1201 = vst.msk [vmem:[%s218 + $0x328] sm:$0xff] %vm1099, %v1056
        %1202 = vst.msk [vmem:[%s218 + $0x330] sm:$0xff] %vm1099, %v1057
        %1203 = vst.msk [vmem:[%s218 + $0x338] sm:$0xff] %vm1099, %v1058
        %1204 = vst.msk [vmem:[%s218 + $0x340] sm:$0xff] %vm1099, %v1059
        %1205 = vst.msk [vmem:[%s218 + $0x348] sm:$0xff] %vm1099, %v1060
        %1206 = vst.msk [vmem:[%s218 + $0x350] sm:$0xff] %vm1099, %v1061
        %1207 = vst.msk [vmem:[%s218 + $0x358] sm:$0xff] %vm1099, %v1062
        %1208 = vst.msk [vmem:[%s218 + $0x360] sm:$0xff] %vm1099, %v1063
        %1209 = vst.msk [vmem:[%s218 + $0x368] sm:$0xff] %vm1099, %v1064
        %1210 = vst.msk [vmem:[%s218 + $0x370] sm:$0xff] %vm1099, %v1065
        %1211 = vst.msk [vmem:[%s218 + $0x378] sm:$0xff] %vm1099, %v1066
        %1212 = vst.msk [vmem:[%s218 + $0x380] sm:$0xff] %vm1099, %v1083
        %1213 = vst.msk [vmem:[%s218 + $0x388] sm:$0xff] %vm1099, %v1084
        %1214 = vst.msk [vmem:[%s218 + $0x390] sm:$0xff] %vm1099, %v1085
        %1215 = vst.msk [vmem:[%s218 + $0x398] sm:$0xff] %vm1099, %v1086
        %1216 = vst.msk [vmem:[%s218 + $0x3a0] sm:$0xff] %vm1099, %v1087
        %1217 = vst.msk [vmem:[%s218 + $0x3a8] sm:$0xff] %vm1099, %v1088
        %1218 = vst.msk [vmem:[%s218 + $0x3b0] sm:$0xff] %vm1099, %v1089
        %1219 = vst.msk [vmem:[%s218 + $0x3b8] sm:$0xff] %vm1099, %v1090
        %1220 = vst.msk [vmem:[%s218 + $0x3c0] sm:$0xff] %vm1099, %v1091
        %1221 = vst.msk [vmem:[%s218 + $0x3c8] sm:$0xff] %vm1099, %v1092
        %1222 = vst.msk [vmem:[%s218 + $0x3d0] sm:$0xff] %vm1099, %v1093
        %1223 = vst.msk [vmem:[%s218 + $0x3d8] sm:$0xff] %vm1099, %v1094
        %1224 = vst.msk [vmem:[%s218 + $0x3e0] sm:$0xff] %vm1099, %v1095
        %1225 = vst.msk [vmem:[%s218 + $0x3e8] sm:$0xff] %vm1099, %v1096
        %1226 = vst.msk [vmem:[%s218 + $0x3f0] sm:$0xff] %vm1099, %v1097
        %1227 = vst.msk [vmem:[%s218 + $0x3f8] sm:$0xff] %vm1099, %v1098
        %s1228 = smul.u32 128, %s18
        %p1229 = scmp.lt.s32.totalorder %s1228, 255
        %s1230 = scalar_select %p1229, %s1228, 255
        %s1231 = smul.addr %s1230, 8
        %s1232 = scalar_lea.vmem %s3, %s1231
        // Predicated region
        $region45: #{tpu_custom_call.1} parent=31 // pred_check
          %p1233 = pneg %p104
        $region46: #{tpu_custom_call.1} parent=31 // pred_check_branch
          %1235 = sbr.rel (%p1233) target = $region48
        $region47: #{tpu_custom_call.1} parent=31 // pred_region
          %s1236 = smul.u32 128, %s18
        $region48: #{tpu_custom_call.1} parent=31 // pred_fallthru
          _
      $region32: #{tpu_custom_call.1} parent=5 // pred_fallthru
        _
      %p1237 = scmp.le.s32.totalorder 2, %s13
      // Predicated region
      $region49: #{tpu_custom_call.1} parent=5 // pred_check
        %p1238 = pneg %p1237
      $region50: #{tpu_custom_call.1} parent=5 // pred_check_branch
        %1240 = sbr.rel (%p1238) target = $region52
      $region51: #{tpu_custom_call.1} parent=5 // pred_region
        %s1241 = ssub.s32 %s13, 2
        // Predicated region
        $region53: #{tpu_custom_call.1} parent=51 // pred_check
          %p1242 = pneg %p110
        $region54: #{tpu_custom_call.1} parent=51 // pred_check_branch
          %1244 = sbr.rel (%p1242) target = $region56
        $region55: #{tpu_custom_call.1} parent=51 // pred_region
          %s1245 = smul.u32 128, %s19
          %p1246 = scmp.lt.s32.totalorder %s1245, 255
          %s1247 = scalar_select %p1246, %s1245, 255
          %s1248 = smul.addr %s1247, 8
          %s1249 = scalar_lea.vmem %s3, %s1248
        $region56: #{tpu_custom_call.1} parent=51 // pred_fallthru
          _
      $region52: #{tpu_custom_call.1} parent=5 // pred_fallthru
        _
    $region6: #{tpu_custom_call.1} parent=1 // loop_footer
      %s17 = sadd.s32 1, %s13
    $region7: #{tpu_custom_call.1} parent=1 // loop_footer_branch
      %12 = sbr.rel target = $region3
    $region8: #{tpu_custom_call.1} parent=1 // loop_exit
      _
    %1250 = vsyncpa [#allocation3], 1
    %s1251 = scalar_lea.sflag [#allocation3], 1
    %1252 = vsyncpa %s1251, 1
    %1253 = vsyncpa [#allocation5], 1

</llo_original>
